<compile_context>
chip_gen: v6e
topology: v6e:2x2x1
jax: 0.10.0
libtpu: 0.0.40
codegen_flags: <defaults>
</compile_context>

<pallas_src>
import functools
import math

import jax
import jax.numpy as jnp
from jax import lax
from jax.experimental import pallas as pl
from jax.experimental.pallas import tpu as pltpu


def make_pe_table(d_model: int, max_len: int = 5000, dtype=jnp.float32):
    """Same math as the PyTorch module's __init__.  Build it once in the
    activation dtype so the hot path never pays a whole-table cast."""
    position = jnp.arange(max_len, dtype=jnp.float32)[:, None]              # (max_len, 1)
    div_term = jnp.exp(
        jnp.arange(0, d_model, 2, dtype=jnp.float32) * (-math.log(10000.0) / d_model)
    )                                                                        # (d_model//2,)
    pe = jnp.zeros((max_len, 1, d_model), dtype=jnp.float32)
    pe = pe.at[:, 0, 0::2].set(jnp.sin(position * div_term))
    pe = pe.at[:, 0, 1::2].set(jnp.cos(position * div_term))
    return pe.astype(dtype)


def _dropout_keep_mask(shape, *, seed: int, base_flat, p: float):
    """Keep-mask (True = keep, probability 1-p) from a counter-based hash.

    Hashes each element's global flat index with a murmur3-style mixer using
    only portable jnp/lax integer ops (works on TPU Mosaic *and* the CPU
    interpreter), then does a 24-bit integer keep test (no int->float convert).
    Mask is deterministic given (layout, seed) and independent of block_s."""
    flat = base_flat.astype(jnp.uint32)
    for d, stride in enumerate(pl.strides_from_shape(shape)):
        flat = flat + (
            lax.broadcasted_iota(jnp.int32, shape, d).astype(jnp.uint32)
            * jnp.uint32(stride)
        )
    h = flat * jnp.uint32(0x9E3779B9) + jnp.uint32(seed & 0xFFFFFFFF)
    h = h ^ (h >> jnp.uint32(16))
    h = h * jnp.uint32(0x85EBCA6B)
    h = h ^ (h >> jnp.uint32(13))
    h = h * jnp.uint32(0xC2B2AE35)
    h = h ^ (h >> jnp.uint32(16))
    threshold = jnp.uint32(int(round(p * float(1 << 24))))
    return (h >> jnp.uint32(8)) >= threshold


def _pe_dropout_kernel(x_ref, pe_ref, o_ref, *, p, train, seed, tile_elems):
    """One seq tile: y = dropout(x + pe).  Works for both the 2D (S, B*D) and
    3D (block_s, B, D) layouts (pe broadcasts over the batch axis in 3D)."""
    # Math in f32 with a single upcast per tile: v5e has no native bf16 VPU,
    # and the 1/(1-p) dropout scale must not be quantized to bf16 pre-multiply.
    y = x_ref[...].astype(jnp.float32) + pe_ref[...].astype(jnp.float32)

    if train and p > 0.0:
        # Inverted dropout matching nn.Dropout(p) training semantics:
        # keep w.p. 1-p, scale kept values by 1/(1-p).
        # TODO(synk): mask is statistically correct but cannot bit-match
        # torch's RNG stream.
        # TODO(synk): on v7x a bf16-packed keep test (2 lanes per u32 word)
        # would halve the PRNG/compare VALU work; kept 32-bit for portability.
        base = (pl.program_id(0) * tile_elems).astype(jnp.uint32)
        keep = _dropout_keep_mask(y.shape, seed=seed, base_flat=base, p=p)
        y = jnp.where(keep, y * (1.0 / (1.0 - p)), 0.0)

    o_ref[...] = y.astype(o_ref.dtype)


def _choose_block_s(S: int, row_bytes: int) -> int:
    """Seq-tile rows: largest tile whose double-buffered working set stays
    ~<=24 MiB (fits v7x's 64 MiB/TC with headroom; trivially fits v5e/v6e),
    while keeping >=2 grid steps so ("parallel",) can use both v7x cores."""
    if S <= 8:
        return S
    bs = (24 * 1024 * 1024) // (2 * max(row_bytes, 1))
    bs = min(bs, -(-S // 2))          # >= 2 grid steps
    bs = max(8, min(bs, S))
    return (bs // 8) * 8


def positional_encoding(x, pe, *, p: float = 0.1, train: bool = False,
                        seed: int = 0, block_s: int | None = None,
                        donate_x: bool = False, force_kernel: bool = False):
    """Forward pass of PositionalEncoding: dropout(x + pe[:seq_len]).

    x: (seq_len, batch, d_model); pe: (max_len, 1, d_model). Returns (S, B, D).
    """
    S, B, D = x.shape
    assert pe.shape[0] >= S and pe.shape[2] == D
    dtype = x.dtype
    itemsize = dtype.itemsize
    apply_dropout = bool(train) and p > 0.0

    # Tiny eval-mode calls: a fused XLA broadcast-add is already at the HBM
    # roofline; custom-call + grid overhead would dominate.
    if (not apply_dropout) and (not force_kernel) and S * B * D * itemsize < (1 << 20):
        return x + pe[:S].astype(dtype)

    if B < 8:
        # Small batch: fold batch into the lane axis -> fully sublane/lane-dense
        # (S, B*D) tiles, zero transposes.  The lane-tiled pe slab is small and
        # built here; hot-path callers should hoist/cache it per (S, B, dtype).
        BD = B * D
        x_k = x.reshape(S, BD)                               # free (contiguous)
        pe_rows = pe[:S, 0, :]
        if pe_rows.dtype != dtype:
            pe_rows = pe_rows.astype(dtype)
        pe_k = jnp.broadcast_to(pe_rows[:, None, :], (S, B, D)).reshape(S, BD)
        row_bytes = 3 * BD * itemsize                        # x + out + pe per seq row
        bs = block_s if block_s is not None else _choose_block_s(S, row_bytes)
        grid = (pl.cdiv(S, bs),)
        tile_elems = bs * BD
        in_specs = [pl.BlockSpec((bs, BD), lambda i: (i, 0)),
                    pl.BlockSpec((bs, BD), lambda i: (i, 0))]
        out_specs = pl.BlockSpec((bs, BD), lambda i: (i, 0))
        out_shape = jax.ShapeDtypeStruct((S, BD), dtype)
    else:
        # Native (S, B, D): block (bs, B, D); the last two dims are the full
        # (B, D) so the (8,128) rule holds and no wrapper transposes are needed.
        x_k = x
        pe_k = pe if pe.dtype == dtype else pe[:S].astype(dtype)
        row_bytes = (2 * B + 1) * D * itemsize
        bs = block_s if block_s is not None else _choose_block_s(S, row_bytes)
        grid = (pl.cdiv(S, bs),)
        tile_elems = bs * B * D
        in_specs = [pl.BlockSpec((bs, B, D), lambda i: (i, 0, 0)),
                    pl.BlockSpec((bs, 1, D), lambda i: (i, 0, 0))]
        out_specs = pl.BlockSpec((bs, B, D), lambda i: (i, 0, 0))
        out_shape = jax.ShapeDtypeStruct((S, B, D), dtype)

    step_bytes = row_bytes * bs
    vmem_limit = int(min(48 * 1024 * 1024, max(32 * 1024 * 1024, 4 * step_bytes)))

    kern = functools.partial(_pe_dropout_kernel, p=float(p), train=apply_dropout,
                             seed=int(seed), tile_elems=int(tile_elems))

    out = pl.pallas_call(
        kern,
        out_shape=out_shape,
        grid=grid,
        in_specs=in_specs,
        out_specs=out_specs,
        compiler_params=pltpu.CompilerParams(
            dimension_semantics=("parallel",),
            vmem_limit_bytes=vmem_limit,
        ),
        input_output_aliases=({0: 0} if donate_x else {}),
    )(x_k, pe_k)

    return out.reshape(S, B, D)


if __name__ == "__main__":
    d_model = 128
    max_len = 64
    seq_len = 16
    p = 0.1

    key = jax.random.PRNGKey(0)
    k1, k2 = jax.random.split(key)

    pe = make_pe_table(d_model, max_len, dtype=jnp.float32)

    # --- Small batch (B=2): exercises the lane-folded (S, B*D) kernel path ---
    x_small = jax.random.normal(k1, (seq_len, 2, d_model), dtype=jnp.float32)
    ref_small = x_small + pe[:seq_len]

    out_eval = jax.block_until_ready(
        positional_encoding(x_small, pe, p=p, train=False, force_kernel=True))
    assert out_eval.shape == (seq_len, 2, d_model)
    assert jnp.allclose(out_eval, ref_small, atol=1e-5, rtol=1e-5)

    # Default dispatch: tiny eval call takes the fused-XLA fast path.
    out_fast = jax.block_until_ready(positional_encoding(x_small, pe, p=p, train=False))
    assert jnp.allclose(out_fast, ref_small, atol=1e-5, rtol=1e-5)

    # Training mode (kernel path, portable hash dropout): every element must be
    # either 0 or the eval value scaled by 1/(1-p), and ~90% should be kept.
    out_train = jax.block_until_ready(
        positional_encoding(x_small, pe, p=p, train=True, seed=123))
    scaled = ref_small / (1.0 - p)
    is_drop = jnp.isclose(out_train, 0.0, atol=1e-6)
    is_keep = jnp.isclose(out_train, scaled, atol=1e-4, rtol=1e-4)
    assert bool(jnp.all(is_drop | is_keep))
    keep_frac = float(jnp.mean(1.0 - is_drop.astype(jnp.float32)))
    assert 0.7 <= keep_frac <= 1.0

    # --- Batch >= 8: exercises the native (S, B, D) kernel path ---
    x_big = jax.random.normal(k2, (seq_len, 8, d_model), dtype=jnp.float32)
    ref_big = x_big + pe[:seq_len]
    out_big = jax.block_until_ready(
        positional_encoding(x_big, pe, p=p, train=False, force_kernel=True))
    assert jnp.allclose(out_big, ref_big, atol=1e-5, rtol=1e-5)

    out_big_train = jax.block_until_ready(
        positional_encoding(x_big, pe, p=p, train=True, seed=7))
    assert out_big_train.shape == (seq_len, 8, d_model)

    print("KERNEL_OK")
</pallas_src>

<mosaic_0001>
module attributes {stable_mosaic.version = 11 : i64} {
  func.func @_pe_dropout_kernel(%arg0: i32, %arg1: memref<8x256xf32, #tpu.memory_space<vmem>>, %arg2: memref<8x256xf32, #tpu.memory_space<vmem>>, %arg3: memref<8x256xf32, #tpu.memory_space<vmem>>) attributes {dimension_semantics = [#tpu.dimension_semantics<parallel>], iteration_bounds = array<i64: 2>, scalar_prefetch = 0 : i64, scratch_operands = 0 : i64, tpu.core_type = #tpu.core_type<tc>, window_params = [{transform_indices = @transform_0, window_bounds = array<i64: 8, 256>}, {transform_indices = @transform_1, window_bounds = array<i64: 8, 256>}, {transform_indices = @transform_2, window_bounds = array<i64: 8, 256>}]} {
    %c0 = arith.constant 0 : index
    %c0_0 = arith.constant 0 : index
    %0 = vector.load %arg1[%c0, %c0_0] : memref<8x256xf32, #tpu.memory_space<vmem>>, vector<8x256xf32>
    %c0_1 = arith.constant 0 : index
    %c0_2 = arith.constant 0 : index
    %1 = vector.load %arg2[%c0_1, %c0_2] : memref<8x256xf32, #tpu.memory_space<vmem>>, vector<8x256xf32>
    %2 = arith.addf %0, %1 : vector<8x256xf32>
    %c0_3 = arith.constant 0 : index
    %c0_4 = arith.constant 0 : index
    %3 = vector.load %arg3[%c0_3, %c0_4] : memref<8x256xf32, #tpu.memory_space<vmem>>, vector<8x256xf32>
    tpu.vector_store %arg3[%c0_3, %c0_4], %2 {strides = array<i32>} : memref<8x256xf32, #tpu.memory_space<vmem>>, vector<8x256xf32>,
    return
  }
  func.func @transform_0(%arg0: i32) -> (i32, i32) {
    %c0_i32 = arith.constant 0 : i32
    %c0_i32_0 = arith.constant 0 : i32
    return %arg0, %c0_i32 : i32, i32
  }
  func.func @transform_1(%arg0: i32) -> (i32, i32) {
    %c0_i32 = arith.constant 0 : i32
    %c0_i32_0 = arith.constant 0 : i32
    return %arg0, %c0_i32 : i32, i32
  }
  func.func @transform_2(%arg0: i32) -> (i32, i32) {
    %c0_i32 = arith.constant 0 : i32
    %c0_i32_0 = arith.constant 0 : i32
    return %arg0, %c0_i32 : i32, i32
  }
}

</mosaic_0001>

<llo_original>
// kernel: tpu_custom_call.1
$region0: #{tpu_custom_call.1}
  #allocation0 [shape = 'u32[]', space=smem, size = 0x4, offset = 0x4, fixed_abs, tag = 'smem constant byte address 0x4 - core index']
  #allocation1 [shape = 'u32[144,128]{1,0:T(1,128)}', space=vmem, size = 0x12000, scoped, tag = 'internal scratch']
  %s0 = inlined_call_operand.hbm [shape: f32[16,256], index: 0, kind: input, shape index: {}]
  %s1 = inlined_call_operand.hbm [shape: f32[16,256], index: 1, kind: input, shape index: {}]
  %s2 = inlined_call_operand.hbm [shape: f32[16,256], index: 2, kind: output, shape index: {}]
  %s3 = sld [smem:[#allocation0]]
  $region49: #{tpu_custom_call.1} parent=0
    _
  %s5 = ssub.s32 1, %s3
  %s6 = scalar_select 0, %s5, %s3
  $region1: #{tpu_custom_call.1} parent=0
    #allocation2 [shape = 'u8[16384]{0}', space=vmem, size = 0x4000, scoped, tag = 'input window, operand 0']
    #allocation3 [shape = 's32[2]{0}', space=sflag, size = 0x8, scoped, tag = 'scoped memory for tpu_custom_call.1']
    #allocation4 [shape = 's32[2]{0}', space=sflag, size = 0x8, scoped, tag = 'scoped memory for tpu_custom_call.1']
    #allocation5 [shape = 'u8[16384]{0}', space=vmem, size = 0x4000, scoped, tag = 'input window, operand 1']
    #allocation6 [shape = 's32[2]{0}', space=sflag, size = 0x8, scoped, tag = 'scoped memory for tpu_custom_call.1']
    #allocation7 [shape = 'u8[16384]{0}', space=vmem, size = 0x4000, scoped, tag = 'output window, operand 0']
    %7 = vsyncpa [#allocation3], 0
    %s8 = scalar_lea.sflag [#allocation3], 1
    %9 = vsyncpa %s8, 0
    %10 = vsyncpa [#allocation6], 0
    %s11 = scalar_lea.sflag [#allocation6], 1
    %12 = vsyncpa %s11, 0
    %13 = vsyncpa [#allocation4], 0
    %s14 = scalar_lea.sflag [#allocation4], 1
    %15 = vsyncpa %s14, 0
    loop: start=0, step=1, limit=4
    $region2: #{tpu_custom_call.1} parent=1 // loop_pre_header
      _
    $region3: #{tpu_custom_call.1} parent=1 // loop_header
      %s17 = sphi 0, %s21
      %p18 = scmp.ge.s32.totalorder %s17, 4
      %s27 = sphi 0, %s29
      %s30 = sphi 0, %s27
      %s31 = sphi 0, %s30
      %s47 = sphi 0, %s31
      %s53 = sphi 0, %s55
      %s56 = sphi 0, %s53
      %s57 = sphi 0, %s56
      %s73 = sphi 0, %s57
      %s79 = sphi 0, %s81
      %s82 = sphi 0, %s79
      %s83 = sphi 0, %s82
      %s99 = sphi 0, %s83
    $region4: #{tpu_custom_call.1} parent=1 // loop_header_branch
      %20 = sbr.rel (%p18) target = $region8
    $region5: #{tpu_custom_call.1} parent=1 // loop_body
      %s22 = ssub.s32 %s17, 1
      %s23 = ssub.s32 %s17, 2
      %s24 = sadd.s32 %s17, 1
      %s25 = ssub.s32 %s17, %s24
      %p26 = scmp.eq.s32.totalorder %s25, 0
      %s28 = sadd.s32 %s27, 1
      %s29 = scalar_select %p26, %s27, %s28
      %p32 = pneg %p26
      %p33 = scmp.eq.s32.totalorder %s17, 1
      %p34 = por %p32, %p33
      %p35 = scmp.ne.s32.totalorder %s27, %s30
      %p36 = scmp.eq.s32.totalorder %s17, 0
      %p37 = por %p35, %p36
      %p38 = scmp.ne.s32.totalorder %s27, %s30
      %p39 = scmp.eq.s32.totalorder %s22, 1
      %p40 = por %p38, %p39
      %p41 = scmp.ne.s32.totalorder %s30, %s31
      %p42 = scmp.eq.s32.totalorder %s22, 0
      %p43 = por %p41, %p42
      %p44 = scmp.ne.s32.totalorder %s30, %s31
      %p45 = scmp.eq.s32.totalorder %s23, 1
      %p46 = por %p44, %p45
      %p48 = scmp.ne.s32.totalorder %s31, %s47
      %p49 = scmp.eq.s32.totalorder %s23, 0
      %p50 = por %p48, %p49
      %s51 = ssub.s32 %s17, %s24
      %p52 = scmp.eq.s32.totalorder %s51, 0
      %s54 = sadd.s32 %s53, 1
      %s55 = scalar_select %p52, %s53, %s54
      %p58 = pneg %p52
      %p59 = scmp.eq.s32.totalorder %s17, 1
      %p60 = por %p58, %p59
      %p61 = scmp.ne.s32.totalorder %s53, %s56
      %p62 = scmp.eq.s32.totalorder %s17, 0
      %p63 = por %p61, %p62
      %p64 = scmp.ne.s32.totalorder %s53, %s56
      %p65 = scmp.eq.s32.totalorder %s22, 1
      %p66 = por %p64, %p65
      %p67 = scmp.ne.s32.totalorder %s56, %s57
      %p68 = scmp.eq.s32.totalorder %s22, 0
      %p69 = por %p67, %p68
      %p70 = scmp.ne.s32.totalorder %s56, %s57
      %p71 = scmp.eq.s32.totalorder %s23, 1
      %p72 = por %p70, %p71
      %p74 = scmp.ne.s32.totalorder %s57, %s73
      %p75 = scmp.eq.s32.totalorder %s23, 0
      %p76 = por %p74, %p75
      %s77 = ssub.s32 %s17, %s24
      %p78 = scmp.eq.s32.totalorder %s77, 0
      %s80 = sadd.s32 %s79, 1
      %s81 = scalar_select %p78, %s79, %s80
      %p84 = pneg %p78
      %p85 = scmp.eq.s32.totalorder %s17, 1
      %p86 = por %p84, %p85
      %p87 = scmp.ne.s32.totalorder %s79, %s82
      %p88 = scmp.eq.s32.totalorder %s17, 0
      %p89 = por %p87, %p88
      %p90 = scmp.ne.s32.totalorder %s79, %s82
      %p91 = scmp.eq.s32.totalorder %s22, 1
      %p92 = por %p90, %p91
      %p93 = scmp.ne.s32.totalorder %s82, %s83
      %p94 = scmp.eq.s32.totalorder %s22, 0
      %p95 = por %p93, %p94
      %p96 = scmp.ne.s32.totalorder %s82, %s83
      %p97 = scmp.eq.s32.totalorder %s23, 1
      %p98 = por %p96, %p97
      %p100 = scmp.ne.s32.totalorder %s83, %s99
      %p101 = scmp.eq.s32.totalorder %s23, 0
      %p102 = por %p100, %p101
      %p103 = scmp.le.s32.totalorder 1, %s17
      %p104 = scmp.lt.s32.totalorder %s17, 3
      %p105 = pnand %p103, %p104
      %p106 = pneg %p105
      // Predicated region
      $region9: #{tpu_custom_call.1} parent=5 // pred_check
        _
      $region10: #{tpu_custom_call.1} parent=5 // pred_check_branch
        %108 = sbr.rel (%p105) target = $region12
      $region11: #{tpu_custom_call.1} parent=5 // pred_region
        %s109 = ssub.s32 %s17, 1
      $region12: #{tpu_custom_call.1} parent=5 // pred_fallthru
        _
      %p110 = scmp.lt.s32.totalorder %s17, 2
      // Predicated region
      $region13: #{tpu_custom_call.1} parent=5 // pred_check
        %p111 = pneg %p110
      $region14: #{tpu_custom_call.1} parent=5 // pred_check_branch
        %113 = sbr.rel (%p111) target = $region16
      $region15: #{tpu_custom_call.1} parent=5 // pred_region
        // Predicated region
        $region17: #{tpu_custom_call.1} parent=15 // pred_check
          %p114 = pneg %p37
        $region18: #{tpu_custom_call.1} parent=15 // pred_check_branch
          %116 = sbr.rel (%p114) target = $region20
        $region19: #{tpu_custom_call.1} parent=15 // pred_region
          %s117 = sand.u32 %s27, 1
          %s118 = scalar_lea.sflag [#allocation3], %s117
          %s119 = sand.u32 %s27, 1
          %s120 = smul.addr %s119, 16
          %s121 = scalar_lea.vmem [#allocation2], %s120
          %s123 = ssub.s32 256, 256
          %124 = vsyncadd %s118, %s123
          %s125 = smul.addr %s17, 2
          %s126 = smul.addr %s125, 128
          %s127 = scalar_lea.hbm %s0, %s126
          %s129 = sshll.u32 %s121, 4
          %s130 = int_to_ptr.vmem [resolvable:$true] %s129
          %132 = dma.hbm_to_vmem [thread:$0]  %s127, 256, %s130, %s118
        $region20: #{tpu_custom_call.1} parent=15 // pred_fallthru
          _
        // Predicated region
        $region21: #{tpu_custom_call.1} parent=15 // pred_check
          %p133 = pneg %p63
        $region22: #{tpu_custom_call.1} parent=15 // pred_check_branch
          %135 = sbr.rel (%p133) target = $region24
        $region23: #{tpu_custom_call.1} parent=15 // pred_region
          %s136 = sand.u32 %s53, 1
          %s137 = scalar_lea.sflag [#allocation6], %s136
          %s138 = sand.u32 %s53, 1
          %s139 = smul.addr %s138, 16
          %s140 = scalar_lea.vmem [#allocation5], %s139
          %s142 = ssub.s32 256, 256
          %143 = vsyncadd %s137, %s142
          %s144 = smul.addr %s17, 2
          %s145 = smul.addr %s144, 128
          %s146 = scalar_lea.hbm %s1, %s145
          %s148 = sshll.u32 %s140, 4
          %s149 = int_to_ptr.vmem [resolvable:$true] %s148
          %151 = dma.hbm_to_vmem [thread:$0]  %s146, 256, %s149, %s137
        $region24: #{tpu_custom_call.1} parent=15 // pred_fallthru
          _
      $region16: #{tpu_custom_call.1} parent=5 // pred_fallthru
        _
      %p152 = scmp.le.s32.totalorder 1, %s17
      %p153 = scmp.lt.s32.totalorder %s17, 3
      %p154 = pnand %p152, %p153
      %p155 = pneg %p154
      // Predicated region
      $region25: #{tpu_custom_call.1} parent=5 // pred_check
        _
      $region26: #{tpu_custom_call.1} parent=5 // pred_check_branch
        %157 = sbr.rel (%p154) target = $region28
      $region27: #{tpu_custom_call.1} parent=5 // pred_region
        %s158 = ssub.s32 %s17, 1
        %s159 = sand.u32 %s30, 1
        %s160 = scalar_lea.sflag [#allocation3], %s159
        %s161 = sand.u32 %s30, 1
        %s162 = smul.addr %s161, 16
        %s163 = scalar_lea.vmem [#allocation2], %s162
        // Predicated region
        $region29: #{tpu_custom_call.1} parent=27 // pred_check
          %p164 = pneg %p43
        $region30: #{tpu_custom_call.1} parent=27 // pred_check_branch
          %166 = sbr.rel (%p164) target = $region32
        $region31: #{tpu_custom_call.1} parent=27 // pred_region
          %167 = dma.done %s160, 256
        $region32: #{tpu_custom_call.1} parent=27 // pred_fallthru
          _
        %s168 = sand.u32 %s56, 1
        %s169 = scalar_lea.sflag [#allocation6], %s168
        %s170 = sand.u32 %s56, 1
        %s171 = smul.addr %s170, 16
        %s172 = scalar_lea.vmem [#allocation5], %s171
        // Predicated region
        $region33: #{tpu_custom_call.1} parent=27 // pred_check
          %p173 = pneg %p69
        $region34: #{tpu_custom_call.1} parent=27 // pred_check_branch
          %175 = sbr.rel (%p173) target = $region36
        $region35: #{tpu_custom_call.1} parent=27 // pred_region
          %176 = dma.done %s169, 256
        $region36: #{tpu_custom_call.1} parent=27 // pred_fallthru
          _
        %s177 = sand.u32 %s30, 1
        %s178 = scalar_lea.sflag [#allocation3], %s177
        %s179 = sand.u32 %s30, 1
        %s180 = smul.addr %s179, 16
        %s181 = scalar_lea.vmem [#allocation2], %s180
        %p182 = pneg %p43
        %p183 = pneg %p40
        %s184 = sand.u32 %s56, 1
        %s185 = scalar_lea.sflag [#allocation6], %s184
        %s186 = sand.u32 %s56, 1
        %s187 = smul.addr %s186, 16
        %s188 = scalar_lea.vmem [#allocation5], %s187
        %p189 = pneg %p69
        %p190 = pneg %p66
        %p191 = pneg %p95
        %p192 = pneg %p92
        %s193 = sand.u32 %s82, 1
        %s194 = scalar_lea.sflag [#allocation4], %s193
        %s195 = sand.u32 %s82, 1
        %s196 = smul.addr %s195, 16
        %s197 = scalar_lea.vmem [#allocation7], %s196
        %v198 = vld [vmem:[%s163] sm:$0xff]
        %v199 = vld [vmem:[%s163 + $0x8] sm:$0xff]
        %v200 = vld [vmem:[%s172] sm:$0xff]
        %v201 = vld [vmem:[%s172 + $0x8] sm:$0xff]
        %v202 = vadd.f32 %v198, %v200
        %v203 = vadd.f32 %v199, %v201
        %204 = vst [vmem:[%s197] sm:$0xff] %v202
        %205 = vst [vmem:[%s197 + $0x8] sm:$0xff] %v203
        %s206 = sand.u32 %s82, 1
        %s207 = scalar_lea.sflag [#allocation4], %s206
        %s208 = sand.u32 %s82, 1
        %s209 = smul.addr %s208, 16
        %s210 = scalar_lea.vmem [#allocation7], %s209
        // Predicated region
        $region37: #{tpu_custom_call.1} parent=27 // pred_check
          %p211 = pneg %p92
        $region38: #{tpu_custom_call.1} parent=27 // pred_check_branch
          %213 = sbr.rel (%p211) target = $region40
        $region39: #{tpu_custom_call.1} parent=27 // pred_region
          %s215 = ssub.s32 256, 256
          %216 = vsyncadd %s207, %s215
          %s217 = smul.addr %s22, 2
          %s218 = smul.addr %s217, 128
          %s219 = scalar_lea.hbm %s2, %s218
          %s221 = sshll.u32 %s210, 4
          %s222 = int_to_ptr.vmem [resolvable:$true] %s221
          %224 = dma.vmem_to_hbm [thread:$0]  %s222, 256, %s219, %s207
        $region40: #{tpu_custom_call.1} parent=27 // pred_fallthru
          _
      $region28: #{tpu_custom_call.1} parent=5 // pred_fallthru
        _
      %p225 = scmp.le.s32.totalorder 2, %s17
      // Predicated region
      $region41: #{tpu_custom_call.1} parent=5 // pred_check
        %p226 = pneg %p225
      $region42: #{tpu_custom_call.1} parent=5 // pred_check_branch
        %228 = sbr.rel (%p226) target = $region44
      $region43: #{tpu_custom_call.1} parent=5 // pred_region
        %s229 = ssub.s32 %s17, 2
        // Predicated region
        $region45: #{tpu_custom_call.1} parent=43 // pred_check
          %p230 = pneg %p98
        $region46: #{tpu_custom_call.1} parent=43 // pred_check_branch
          %232 = sbr.rel (%p230) target = $region48
        $region47: #{tpu_custom_call.1} parent=43 // pred_region
          %s233 = sand.u32 %s83, 1
          %s234 = scalar_lea.sflag [#allocation4], %s233
          %s235 = sand.u32 %s83, 1
          %s236 = smul.addr %s235, 16
          %s237 = scalar_lea.vmem [#allocation7], %s236
          %238 = dma.done %s234, 256
        $region48: #{tpu_custom_call.1} parent=43 // pred_fallthru
          _
      $region44: #{tpu_custom_call.1} parent=5 // pred_fallthru
        _
    $region6: #{tpu_custom_call.1} parent=1 // loop_footer
      %s21 = sadd.s32 1, %s17
    $region7: #{tpu_custom_call.1} parent=1 // loop_footer_branch
      %16 = sbr.rel target = $region3
    $region8: #{tpu_custom_call.1} parent=1 // loop_exit
      _
    %239 = vsyncpa [#allocation3], 1
    %s240 = scalar_lea.sflag [#allocation3], 1
    %241 = vsyncpa %s240, 1
    %242 = vsyncpa [#allocation6], 1
    %s243 = scalar_lea.sflag [#allocation6], 1
    %244 = vsyncpa %s243, 1
    %245 = vsyncpa [#allocation4], 1
    %s246 = scalar_lea.sflag [#allocation4], 1
    %247 = vsyncpa %s246, 1

</llo_original>
